<compile_context>
chip_gen: v6e
topology: v6e:2x2x1
jax: 0.10.0
libtpu: 0.0.40
codegen_flags: <defaults>
</compile_context>

<pallas_src>
import functools

import jax
import jax.numpy as jnp
from jax.experimental import pallas as pl
from jax.experimental.pallas import tpu as pltpu


_VMEM_LIMIT_BYTES = 32 * 1024 * 1024   # explicit scoped-VMEM request (safe on v5e/v6e/v7x)
_VMEM_TILE_BUDGET = 20 * 1024 * 1024   # what the tile picker may consume (headroom under limit)


def _round_up(x, m):
    return ((x + m - 1) // m) * m


def _pick_vocab_tile(V, bytes_per_col, budget=_VMEM_TILE_BUDGET):
    """Largest vocab tile: full V if it fits (single grid step), else the largest multiple of
    128 that divides V and fits the budget.  bytes_per_col must include double buffering and
    sublane padding of every tiled operand."""
    if V * bytes_per_col <= budget:
        return V                      # single grid step — no per-step pipeline overhead
    if V % 128 == 0:
        nlanes = V // 128
        best = 128
        for m in range(1, nlanes + 1):            # all multiples of 128 dividing V
            if nlanes % m:
                continue
            t = m * 128
            if t * bytes_per_col <= budget:
                best = max(best, t)
        return best
    return V  # V not a multiple of 128: only a full-width block is legal without padding


def _default_num_splits(total_bytes, n_tiles):
    """Split the vocab reduction across TensorCores only on megacore (v7x-class) parts and only
    when there is enough traffic to amortize the second partial + combine."""
    try:
        kind = jax.devices()[0].device_kind.lower()
    except Exception:  # pragma: no cover
        kind = ""
    megacore = ("v7" in kind) or ("7x" in kind)
    if megacore and total_bytes >= (1 << 20) and n_tiles >= 2 and n_tiles % 2 == 0:
        return 2
    return 1


# ----------------------------- Fused lm_head + value-head kernel -----------------------------

def _fused_value_head_kernel(h_ref, w_head_ref, w_ln_ref, out_ref, acc_ref):
    """Grid = (splits, vocab_tiles).  Each step: MXU logits tile -> bf16 round -> VPU*XLU reduce."""
    k = pl.program_id(1)

    @pl.when(k == 0)
    def _():
        acc_ref[...] = jnp.zeros_like(acc_ref)

    # [B, H] x [H, tv] -> [B, tv] f32 on the MXU; logits stay in VMEM (no HBM round-trip).
    logits = jnp.dot(h_ref[...], w_head_ref[...], preferred_element_type=jnp.float32)
    # bf16 rounding matches the module feeding bf16 logits into the bf16 nn.Linear.
    x = logits.astype(jnp.bfloat16).astype(jnp.float32)      # [B, tv]
    w = w_ln_ref[...].astype(jnp.float32)                    # [1, tv] (lane-dense)
    acc_ref[...] += jnp.sum(x * w, axis=-1, keepdims=True)   # f32 accumulate, XLU reduce

    @pl.when(k == pl.num_programs(1) - 1)
    def _():
        out_ref[...] = acc_ref[...]                           # per-split partial sum (f32)


def fused_value_head(h_last, lm_head, w_row_bf16, b_bf16, *, tv=None, num_splits=None):
    """h_last: [B, H] bf16, lm_head: [H, V] bf16, w_row_bf16: [1, V] bf16, b: scalar -> [B] bf16."""
    B, H = h_last.shape
    H2, V = lm_head.shape
    assert H == H2 and w_row_bf16.shape == (1, V)
    h_last = h_last.astype(jnp.bfloat16)
    lm_head = lm_head.astype(jnp.bfloat16)

    if tv is None:
        h_pad = max(_round_up(H, 16), 16)        # bf16 sublane packing
        b_pad = max(_round_up(B, 8), 8)          # f32 logits temp
        bytes_per_col = 2 * h_pad * 2 + 2 * 16 * 2 + b_pad * 4
        tv = _pick_vocab_tile(V, bytes_per_col)
    assert V % tv == 0
    n_tiles = V // tv

    if num_splits is None:
        num_splits = _default_num_splits(max(B, H) * V * 2, n_tiles)
    if n_tiles % num_splits != 0:
        num_splits = 1
    kt = n_tiles // num_splits

    cost = pl.CostEstimate(
        flops=2 * B * H * V + 2 * B * V,
        transcendentals=0,
        bytes_accessed=B * H * 2 + H * V * 2 + V * 2 + 4 * B * num_splits,
    )

    partial = pl.pallas_call(
        _fused_value_head_kernel,
        out_shape=jax.ShapeDtypeStruct((num_splits, B, 1), jnp.float32),
        grid_spec=pltpu.PrefetchScalarGridSpec(
            num_scalar_prefetch=0,
            grid=(num_splits, kt),
            in_specs=[
                pl.BlockSpec((B, H), lambda s, k: (0, 0)),                        # resident hidden
                pl.BlockSpec((H, tv), lambda s, k, kt=kt: (0, s * kt + k)),       # lm_head tile
                pl.BlockSpec((1, tv), lambda s, k, kt=kt: (0, s * kt + k)),       # ln_w tile
            ],
            out_specs=pl.BlockSpec((None, B, 1), lambda s, k: (s, 0, 0)),         # per-split partial
            scratch_shapes=[pltpu.VMEM((B, 1), jnp.float32)],
        ),
        compiler_params=pltpu.CompilerParams(
            dimension_semantics=("parallel", "arbitrary"),
            vmem_limit_bytes=_VMEM_LIMIT_BYTES,
        ),
        cost_estimate=cost,
    )(h_last, lm_head, w_row_bf16)

    value_f32 = partial.sum(axis=0)[:, 0] + b_bf16.astype(jnp.float32)
    return value_f32.astype(jnp.bfloat16)


# ----------------------------- Standalone value-head kernel (opaque base) -----------------------------

def _value_head_kernel(logits_ref, w_ref, out_ref, acc_ref):
    """Grid = (splits, vocab_tiles).  bf16 logits tile -> single f32 widen -> VPU*XLU reduce."""
    k = pl.program_id(1)

    @pl.when(k == 0)
    def _():
        acc_ref[...] = jnp.zeros_like(acc_ref)

    x = logits_ref[...].astype(jnp.float32)                   # [B, tv] bf16 -> f32 widen
    w = w_ref[...].astype(jnp.float32)                        # [1, tv]
    acc_ref[...] += jnp.sum(x * w, axis=-1, keepdims=True)    # f32 accumulate

    @pl.when(k == pl.num_programs(1) - 1)
    def _():
        out_ref[...] = acc_ref[...]


def value_head(logits_bf16, w_row_bf16, b_bf16, *, tv=None, num_splits=None):
    """logits_bf16: [B, V] bf16, w_row_bf16: [1, V] bf16, b: scalar bf16 -> [B] bf16."""
    B, V = logits_bf16.shape
    assert w_row_bf16.shape == (1, V)
    logits_bf16 = logits_bf16.astype(jnp.bfloat16)

    if tv is None:
        b_pad = max(_round_up(B, 16), 16)        # bf16 sublane packing
        bytes_per_col = 2 * b_pad * 2 + 2 * 16 * 2
        tv = _pick_vocab_tile(V, bytes_per_col)
    assert V % tv == 0
    n_tiles = V // tv

    if num_splits is None:
        num_splits = _default_num_splits(B * V * 2, n_tiles)
    if n_tiles % num_splits != 0:
        num_splits = 1
    kt = n_tiles // num_splits

    cost = pl.CostEstimate(
        flops=2 * B * V,
        transcendentals=0,
        bytes_accessed=B * V * 2 + V * 2 + 4 * B * num_splits,
    )

    partial = pl.pallas_call(
        _value_head_kernel,
        out_shape=jax.ShapeDtypeStruct((num_splits, B, 1), jnp.float32),
        grid_spec=pltpu.PrefetchScalarGridSpec(
            num_scalar_prefetch=0,
            grid=(num_splits, kt),
            in_specs=[
                pl.BlockSpec((B, tv), lambda s, k, kt=kt: (0, s * kt + k)),   # bf16 logits tile
                pl.BlockSpec((1, tv), lambda s, k, kt=kt: (0, s * kt + k)),   # ln_w tile
            ],
            out_specs=pl.BlockSpec((None, B, 1), lambda s, k: (s, 0, 0)),
            scratch_shapes=[pltpu.VMEM((B, 1), jnp.float32)],
        ),
        compiler_params=pltpu.CompilerParams(
            dimension_semantics=("parallel", "arbitrary"),
            vmem_limit_bytes=_VMEM_LIMIT_BYTES,
        ),
        cost_estimate=cost,
    )(logits_bf16, w_row_bf16)

    value_f32 = partial.sum(axis=0)[:, 0] + b_bf16.astype(jnp.float32)
    return value_f32.astype(jnp.bfloat16)


# ----------------------------- Synthetic base model (glue JAX) -----------------------------
# TODO(synk): the real ChatGLM base model is an external transformer; replaced here with a
# deterministic masked-embedding "hidden state" so the module's forward has well-defined logits.

def synthetic_base_last_hidden(input_ids, attention_mask, embed):
    h = embed[input_ids]                                       # [B, T, H]
    h = h * attention_mask[..., None].astype(h.dtype)          # apply mask
    return h[:, -1]                                            # [B, H] (last token)


# ----------------------------- Module wrapper -----------------------------

class ChatGLM_VM_Pallas:
    def __init__(self, vocab_size, hidden, num_classes=1, seed=0):
        assert num_classes == 1
        key = jax.random.PRNGKey(seed)
        k_emb, k_head, k_w, k_b = jax.random.split(key, 4)
        # synthetic "base_model" params
        self.embed = jax.random.normal(k_emb, (vocab_size, hidden), jnp.float32) * 0.02
        self.lm_head = (jax.random.normal(k_head, (hidden, vocab_size), jnp.float32)
                        * 0.02).astype(jnp.bfloat16)           # [H, V] bf16
        # LN = nn.Linear(vocab_size, 1, dtype=bf16); weight stored lane-dense [1, V], bias scalar.
        bound = 1.0 / (vocab_size ** 0.5)
        self.ln_w = jax.random.uniform(
            k_w, (1, vocab_size), jnp.float32, -bound, bound).astype(jnp.bfloat16)
        self.ln_b = jax.random.uniform(
            k_b, (), jnp.float32, -bound, bound).astype(jnp.bfloat16)

    @functools.partial(jax.jit, static_argnums=0)
    def __call__(self, input_ids, attention_mask):
        h_last = synthetic_base_last_hidden(
            input_ids, attention_mask, self.embed).astype(jnp.bfloat16)   # [B, H] bf16
        # Fused path: logits[:, -1] computed per vocab tile inside the kernel (never hits HBM).
        return fused_value_head(h_last, self.lm_head, self.ln_w, self.ln_b)   # [B] bf16


# ----------------------------- Main -----------------------------

if __name__ == "__main__":
    B, T, H, V = 2, 8, 32, 256   # small shapes; V a multiple of 128 for lane tiling

    key = jax.random.PRNGKey(0)
    k_ids, _ = jax.random.split(key)
    input_ids = jax.random.randint(k_ids, (B, T), 0, V, dtype=jnp.int32)
    attention_mask = jnp.ones((B, T), dtype=jnp.int32)

    model = ChatGLM_VM_Pallas(vocab_size=V, hidden=H, num_classes=1, seed=0)
    out = jax.block_until_ready(model(input_ids, attention_mask))
    assert out.shape == (B,)
    assert out.dtype == jnp.bfloat16

    # Reference (pure JAX, same math: bf16 logits -> f32 multiply-reduce -> +bias -> bf16)
    h_last = synthetic_base_last_hidden(
        input_ids, attention_mask, model.embed).astype(jnp.bfloat16)
    logits_ref = jnp.dot(h_last, model.lm_head, preferred_element_type=jnp.float32)
    logits_bf16 = logits_ref.astype(jnp.bfloat16)
    ref = (jnp.sum(logits_bf16.astype(jnp.float32) * model.ln_w.astype(jnp.float32), axis=-1)
           + model.ln_b.astype(jnp.float32)).astype(jnp.bfloat16)
    assert jnp.allclose(out.astype(jnp.float32), ref.astype(jnp.float32), atol=2e-2, rtol=2e-2)

    # Standalone (opaque-base) kernel: multi-tile reduction + explicit split combine path.
    kx = jax.random.PRNGKey(1)
    kl, kw, kb = jax.random.split(kx, 3)
    B2, V2 = 8, 1024
    lg = jax.random.normal(kl, (B2, V2), jnp.float32).astype(jnp.bfloat16)
    w2 = (jax.random.normal(kw, (1, V2), jnp.float32) * 0.05).astype(jnp.bfloat16)
    b2 = jnp.float32(0.25).astype(jnp.bfloat16)
    ref2 = (jnp.sum(lg.astype(jnp.float32) * w2.astype(jnp.float32), axis=-1)
            + b2.astype(jnp.float32)).astype(jnp.bfloat16)

    got = jax.block_until_ready(value_head(lg, w2, b2, tv=256, num_splits=2))
    assert got.shape == (B2,) and got.dtype == jnp.bfloat16
    assert jnp.allclose(got.astype(jnp.float32), ref2.astype(jnp.float32), atol=2e-2, rtol=2e-2)

    # Auto policy path (single full-width tile, per-generation split default).
    got_auto = jax.block_until_ready(value_head(lg, w2, b2))
    assert jnp.allclose(got_auto.astype(jnp.float32), ref2.astype(jnp.float32),
                        atol=2e-2, rtol=2e-2)

    print("KERNEL_OK")
</pallas_src>

<mosaic_0001>
module attributes {stable_mosaic.version = 11 : i64} {
  func.func @_fused_value_head_kernel(%arg0: i32, %arg1: i32, %arg2: memref<2x32xbf16, #tpu.memory_space<vmem>>, %arg3: memref<32x256xbf16, #tpu.memory_space<vmem>>, %arg4: memref<1x256xbf16, #tpu.memory_space<vmem>>, %arg5: memref<1x2x1xf32, #tpu.memory_space<vmem>>, %arg6: memref<2x1xf32, #tpu.memory_space<vmem>>) attributes {dimension_semantics = [#tpu.dimension_semantics<parallel>, #tpu.dimension_semantics<arbitrary>], iteration_bounds = array<i64: 1, 1>, scalar_prefetch = 0 : i64, scratch_operands = 1 : i64, tpu.core_type = #tpu.core_type<tc>, window_params = [{pipeline_mode = #tpu.pipeline_mode<synchronous>, transform_indices = @transform_0, window_bounds = array<i64: 2, 32>}, {transform_indices = @transform_1, window_bounds = array<i64: 32, 256>}, {transform_indices = @transform_2, window_bounds = array<i64: 1, 256>}, {transform_indices = @transform_3, window_bounds = array<i64: 1, 2, 1>}]} {
    %c0_i32 = arith.constant 0 : i32
    %0 = arith.cmpi eq, %arg1, %c0_i32 : i32
    %1 = arith.extui %0 : i1 to i32
    %c0_i32_0 = arith.constant 0 : i32
    %2 = arith.cmpi ne, %1, %c0_i32_0 : i32
    scf.if %2 {
      %cst_13 = arith.constant 0.000000e+00 : f32
      %20 = vector.broadcast %cst_13 : f32 to vector<2x1xf32>
      %c0_14 = arith.constant 0 : index
      %c0_15 = arith.constant 0 : index
      %21 = vector.load %arg6[%c0_14, %c0_15] : memref<2x1xf32, #tpu.memory_space<vmem>>, vector<2x1xf32>
      tpu.vector_store %arg6[%c0_14, %c0_15], %20 {strides = array<i32>} : memref<2x1xf32, #tpu.memory_space<vmem>>, vector<2x1xf32>,
    } else {
    }
    %c0 = arith.constant 0 : index
    %c0_1 = arith.constant 0 : index
    %3 = vector.load %arg2[%c0, %c0_1] : memref<2x32xbf16, #tpu.memory_space<vmem>>, vector<2x32xbf16>
    %c0_2 = arith.constant 0 : index
    %c0_3 = arith.constant 0 : index
    %4 = vector.load %arg3[%c0_2, %c0_3] : memref<32x256xbf16, #tpu.memory_space<vmem>>, vector<32x256xbf16>
    %cst = arith.constant dense<0.000000e+00> : vector<2x256xf32>
    %5 = tpu.matmul %3, %4, %cst {dimension_numbers = #tpu.dot_dimension_numbers<[1], [0], [0], [1], [0, 0, 1, 1], [], []>} : vector<2x32xbf16>, vector<32x256xbf16>, vector<2x256xf32> -> vector<2x256xf32>
    %6 = arith.truncf %5 : vector<2x256xf32> to vector<2x256xbf16>
    %7 = arith.extf %6 : vector<2x256xbf16> to vector<2x256xf32>
    %c0_4 = arith.constant 0 : index
    %c0_5 = arith.constant 0 : index
    %8 = vector.load %arg4[%c0_4, %c0_5] : memref<1x256xbf16, #tpu.memory_space<vmem>>, vector<1x256xbf16>
    %9 = arith.extf %8 : vector<1x256xbf16> to vector<1x256xf32>
    %c0_6 = arith.constant 0 : index
    %c0_7 = arith.constant 0 : index
    %10 = vector.load %arg6[%c0_6, %c0_7] : memref<2x1xf32, #tpu.memory_space<vmem>>, vector<2x1xf32>
    %11 = vector.broadcast %9 : vector<1x256xf32> to vector<2x256xf32>
    %12 = arith.mulf %7, %11 : vector<2x256xf32>
    %cst_8 = arith.constant dense<0.000000e+00> : vector<2xf32>
    %13 = vector.multi_reduction <add>, %12, %cst_8 [1] : vector<2x256xf32> to vector<2xf32>
    %14 = vector.shape_cast %13 : vector<2xf32> to vector<2x1xf32>
    %15 = arith.addf %10, %14 : vector<2x1xf32>
    %c0_9 = arith.constant 0 : index
    %c0_10 = arith.constant 0 : index
    %16 = vector.load %arg6[%c0_9, %c0_10] : memref<2x1xf32, #tpu.memory_space<vmem>>, vector<2x1xf32>
    tpu.vector_store %arg6[%c0_9, %c0_10], %15 {strides = array<i32>} : memref<2x1xf32, #tpu.memory_space<vmem>>, vector<2x1xf32>,
    %c0_i32_11 = arith.constant 0 : i32
    %17 = arith.cmpi eq, %arg1, %c0_i32_11 : i32
    %18 = arith.extui %17 : i1 to i32
    %c0_i32_12 = arith.constant 0 : i32
    %19 = arith.cmpi ne, %18, %c0_i32_12 : i32
    scf.if %19 {
      %c0_13 = arith.constant 0 : index
      %c0_14 = arith.constant 0 : index
      %20 = vector.load %arg6[%c0_13, %c0_14] : memref<2x1xf32, #tpu.memory_space<vmem>>, vector<2x1xf32>
      %c0_15 = arith.constant 0 : index
      %c0_16 = arith.constant 0 : index
      %c0_17 = arith.constant 0 : index
      %21 = vector.load %arg5[%c0_15, %c0_16, %c0_17] : memref<1x2x1xf32, #tpu.memory_space<vmem>>, vector<1x2x1xf32>
      %22 = vector.shape_cast %21 : vector<1x2x1xf32> to vector<2x1xf32>
      %23 = vector.shape_cast %20 : vector<2x1xf32> to vector<1x2x1xf32>
      tpu.vector_store %arg5[%c0_15, %c0_16, %c0_17], %23 {strides = array<i32>} : memref<1x2x1xf32, #tpu.memory_space<vmem>>, vector<1x2x1xf32>,
    } else {
    }
    return
  }
  func.func @transform_0(%arg0: i32, %arg1: i32) -> (i32, i32) {
    %c0_i32 = arith.constant 0 : i32
    %c0_i32_0 = arith.constant 0 : i32
    %c0_i32_1 = arith.constant 0 : i32
    return %c0_i32, %c0_i32_0 : i32, i32
  }
  func.func @transform_1(%arg0: i32, %arg1: i32) -> (i32, i32) {
    %c1_i32 = arith.constant 1 : i32
    %0 = arith.muli %arg0, %c1_i32 : i32
    %1 = arith.addi %0, %arg1 : i32
    %c0_i32 = arith.constant 0 : i32
    %c0_i32_0 = arith.constant 0 : i32
    return %c0_i32, %1 : i32, i32
  }
  func.func @transform_2(%arg0: i32, %arg1: i32) -> (i32, i32) {
    %c1_i32 = arith.constant 1 : i32
    %0 = arith.muli %arg0, %c1_i32 : i32
    %1 = arith.addi %0, %arg1 : i32
    %c0_i32 = arith.constant 0 : i32
    %c0_i32_0 = arith.constant 0 : i32
    return %c0_i32, %1 : i32, i32
  }
  func.func @transform_3(%arg0: i32, %arg1: i32) -> (i32, i32, i32) {
    %c0_i32 = arith.constant 0 : i32
    %c0_i32_0 = arith.constant 0 : i32
    %c0_i32_1 = arith.constant 0 : i32
    return %arg0, %c0_i32, %c0_i32_0 : i32, i32, i32
  }
}

</mosaic_0001>

<llo_original>
// kernel: a_call__.1
$region0: #{a_call__.1}
  #allocation0 [shape = 'u32[]', space=smem, size = 0x4, offset = 0x4, fixed_abs, tag = 'smem constant byte address 0x4 - core index']
  #allocation1 [shape = 'u32[144,128]{1,0:T(1,128)}', space=vmem, size = 0x12000, scoped, tag = 'internal scratch']
  #allocation2 [shape = 'f32[2,1]{1,0:T(2,128)}', space=vmem, size = 0x400, scoped, tag = 'scratch operand']
  %s0 = inlined_call_operand.vmem [shape: bf16[2,32], index: 0, kind: input, shape index: {}]
  %s1 = inlined_call_operand.vmem [shape: bf16[32,256], index: 1, kind: input, shape index: {}]
  %s2 = inlined_call_operand.vmem [shape: bf16[1,256], index: 2, kind: input, shape index: {}]
  %s3 = inlined_call_operand.vmem [shape: f32[1,2,1], index: 3, kind: output, shape index: {}]
  %s4 = sld [smem:[#allocation0]]
  $region30: #{a_call__.1} parent=0
    _
  %s6 = ssub.s32 1, %s4
  %s7 = scalar_select 0, %s6, %s4
  // Predicated region
  $region2: #{a_call__.1} parent=0 // pred_check
    _
  $region3: #{a_call__.1} parent=0 // pred_check_branch
    %9 = sbr.rel (0) target = $region5
  $region4: #{a_call__.1} parent=0 // pred_region
    _
  $region5: #{a_call__.1} parent=0 // pred_fallthru
    _
  // Predicated region
  $region6: #{a_call__.1} parent=0 // pred_check
    _
  $region7: #{a_call__.1} parent=0 // pred_check_branch
    %11 = sbr.rel (0) target = $region9
  $region8: #{a_call__.1} parent=0 // pred_region
    %s12 = sadd.s32 0, 0
    %s13 = smul.u32 2, %s12
    %p14 = scmp.lt.s32.totalorder %s13, 1
    %s15 = scalar_select %p14, %s13, 1
    %s16 = smul.addr %s15, 4
    %s17 = scalar_lea.vmem %s1, %s16
    %s18 = sadd.s32 0, 0
    %s19 = smul.u32 2, %s18
  $region9: #{a_call__.1} parent=0 // pred_fallthru
    _
  // Predicated region
  $region10: #{a_call__.1} parent=0 // pred_check
    _
  $region11: #{a_call__.1} parent=0 // pred_check_branch
    %21 = sbr.rel (0) target = $region13
  $region12: #{a_call__.1} parent=0 // pred_region
    %s22 = sadd.s32 0, 0
    %s23 = smul.u32 2, %s22
    %p24 = scmp.lt.s32.totalorder %s23, 1
    %s25 = scalar_select %p24, %s23, 1
    %s26 = scalar_lea.vmem %s2, %s25
    %s27 = sadd.s32 0, 0
    %s28 = smul.u32 2, %s27
  $region13: #{a_call__.1} parent=0 // pred_fallthru
    _
  %s29 = sadd.s32 0, 0
  %s30 = smul.u32 2, %s29
  %p31 = scmp.lt.s32.totalorder %s30, 1
  %s32 = scalar_select %p31, %s30, 1
  %s33 = smul.addr %s32, 4
  %s34 = scalar_lea.vmem %s1, %s33
  %s35 = sadd.s32 0, 0
  %s36 = smul.u32 2, %s35
  %p37 = scmp.lt.s32.totalorder %s36, 1
  %s38 = scalar_select %p37, %s36, 1
  %s39 = scalar_lea.vmem %s2, %s38
  %s40 = sadd.s32 0, 0
  %s41 = smul.u32 2, %s40
  %p42 = scmp.lt.s32.totalorder %s41, 1
  %s43 = scalar_select %p42, %s41, 1
  %s44 = smul.addr %s43, 4
  %s45 = scalar_lea.vmem %s1, %s44
  %s46 = sadd.s32 0, 0
  %s47 = smul.u32 2, %s46
  %s48 = sadd.s32 0, 0
  %s49 = smul.u32 2, %s48
  %p50 = scmp.lt.s32.totalorder %s49, 1
  %s51 = scalar_select %p50, %s49, 1
  %s52 = scalar_lea.vmem %s2, %s51
  %s53 = sadd.s32 0, 0
  %s54 = smul.u32 2, %s53
  %p56 = scmp.eq.s32.totalorder 0, 0
  // Predicated region
  $region14: #{a_call__.1} parent=0 // pred_check
    %p57 = pneg %p56
  $region15: #{a_call__.1} parent=0 // pred_check_branch
    %59 = sbr.rel (%p57) target = $region17
  $region16: #{a_call__.1} parent=0 // pred_region
    %vm60 = vcmask 1024
    %61 = vst.msk [vmem:[#allocation2] sm:$0x3] %vm60, 0.0
  $region17: #{a_call__.1} parent=0 // pred_fallthru
    _
  %v62 = vld [vmem:[%s0] sm:$0x1]
  %v63 = vld [vmem:[%s45] sm:$0xff]
  %v64 = vld [vmem:[%s45 + $0x8] sm:$0xff]
  %v65 = vld [vmem:[%s45 + $0x10] sm:$0xff]
  %v66 = vld [vmem:[%s45 + $0x18] sm:$0xff]
  %v71 = vunpack.c.l.b16 %v63
  %v72 = vunpack.c.h.b16 %v63
  %v73 = vunpack.c.l.b16 %v64
  %v74 = vunpack.c.h.b16 %v64
  %v75 = vunpack.c.l.b16 %v65
  %v76 = vunpack.c.h.b16 %v65
  %v77 = vunpack.c.l.b16 %v66
  %v78 = vunpack.c.h.b16 %v66
  %v79 = vpack.c.b16 %v73, %v71
  %v80 = vpack.c.b16 %v74, %v72
  %v81 = vpack.c.b16 %v77, %v75
  %v82 = vpack.c.b16 %v78, %v76
  %vm87 = vcmask 261120
  %v89 = vsel %vm87, %v62, 0
  %91 = vmatprep.subr.bf16.mxu0 0
  %92 = vmatpush1.bf16.msra.mxu0 0
  %93 = vmatprep.subr.bf16.mxu0 0
  %94 = vmatpush1.bf16.msra.mxu0 0
  %95 = vmatprep.subr.bf16.mxu0 0
  %96 = vmatpush1.bf16.msra.mxu0 0
  %97 = vmatprep.subr.bf16.mxu0 0
  %98 = vmatpush1.bf16.msra.mxu0 0
  %99 = vmatprep.subr.bf16.mxu0 0
  %100 = vmatpush1.bf16.msra.mxu0 0
  %101 = vmatprep.subr.bf16.mxu0 0
  %102 = vmatpush1.bf16.msra.mxu0 0
  %103 = vmatprep.subr.bf16.mxu0 %v82
  %104 = vmatpush1.bf16.msra.mxu0 %v81
  %105 = vmatprep.subr.bf16.mxu0 %v80
  %106 = vmatpush1.bf16.msra.mxu0 %v79
  %107 = vmatprep.subr.bf16.mxu0 0
  %108 = vmatpush2.bf16.msra.mxu0 0
  %109 = vmatprep.subr.bf16.mxu0 0
  %110 = vmatpush2.bf16.msra.mxu0 0
  %111 = vmatprep.subr.bf16.mxu0 0
  %112 = vmatpush2.bf16.msra.mxu0 0
  %113 = vmatprep.subr.bf16.mxu0 0
  %114 = vmatpush2.bf16.msra.mxu0 0
  %115 = vmatprep.subr.bf16.mxu0 0
  %116 = vmatpush2.bf16.msra.mxu0 0
  %117 = vmatprep.subr.bf16.mxu0 0
  %118 = vmatpush2.bf16.msra.mxu0 0
  %119 = vmatprep.subr.bf16.mxu0 0
  %120 = vmatpush2.bf16.msra.mxu0 0
  %121 = vmatprep.subr.bf16.mxu0 0
  %122 = vmatpush2.bf16.msra.mxu0 0
  %123 = vmatprep.mubr.bf16.mxu0 0
  %124 = vmatmul.mubr.bf16.gmra.mxu0 %v89
  %v125 = vpop.f32.mrf.mxu0
  %v126 = vadd.f32 0.0, %v125
  %v127 = vpop.f32.mrf.mxu0
  %v128 = vadd.f32 0.0, %v127
  %v129 = vpop.f32.mrf.mxu0
  %v130 = vpop.f32.mrf.mxu0
  %131 = vdwg.mxu0
  %v132 = vpack.c.bf16 %v126, %v126
  %v133 = vpack.c.bf16 %v128, %v128
  %v134 = vunpack.c.l.bf16 %v132
  %v135 = vunpack.c.l.bf16 %v133
  %v136 = vld [vmem:[%s52] sm:$0x3]
  %v137 = vunpack.c.l.bf16 %v136
  %v138 = vld [vmem:[#allocation2] sm:$0x3]
  %v140 = vlaneseq
  %v141 = vshrl.u32 %v140, 7
  %v142 = vsub.s32 0, %v141
  %v143 = vrot.slane %v137, %v142
  %v144 = vlaneseq
  %v145 = vshrl.u32 %v144, 7
  %v146 = vsub.s32 2, %v145
  %v147 = vrot.slane %v137, %v146
  %v150 = vlaneseq
  %v151 = vshrl.u32 %v150, 7
  %v152 = vsub.s32 0, %v151
  %v153 = vrot.slane %v143, %v152
  %v154 = vlaneseq
  %v155 = vshrl.u32 %v154, 7
  %v156 = vsub.s32 0, %v155
  %v157 = vrot.slane %v147, %v156
  %v158 = vmul.f32 %v134, %v153
  %v159 = vmul.f32 %v135, %v157
  %vm160 = vcmask 1041408
  %v161 = vsel %vm160, %v158, 0.0
  %v162 = vsel %vm160, %v159, 0.0
  %v163 = vadd.f32 %v161, %v162
  %164 = vadd.xlane.f32.xlu0 %v163
  %v165 = vpop.xlane.xlu0 %164
  %v166 = vadd.f32 %v138, %v165
  %vm167 = vcmask 1024
  %168 = vst.msk [vmem:[#allocation2] sm:$0x3] %vm167, %v166
  // Predicated region
  $region18: #{a_call__.1} parent=0 // pred_check
    %p169 = pneg %p56
  $region19: #{a_call__.1} parent=0 // pred_check_branch
    %171 = sbr.rel (%p169) target = $region21
  $region20: #{a_call__.1} parent=0 // pred_region
    %v172 = vld [vmem:[#allocation2] sm:$0x3]
    %173 = vst.msk [vmem:[%s3] sm:$0x3] %vm167, %v172
  $region21: #{a_call__.1} parent=0 // pred_fallthru
    _
  // Predicated region
  $region22: #{a_call__.1} parent=0 // pred_check
    _
  $region23: #{a_call__.1} parent=0 // pred_check_branch
    %175 = sbr.rel (0) target = $region25
  $region24: #{a_call__.1} parent=0 // pred_region
    _
  $region25: #{a_call__.1} parent=0 // pred_fallthru
    _
  // Predicated region
  $region26: #{a_call__.1} parent=0 // pred_check
    _
  $region27: #{a_call__.1} parent=0 // pred_check_branch
    %177 = sbr.rel (0) target = $region29
  $region28: #{a_call__.1} parent=0 // pred_region
    _
  $region29: #{a_call__.1} parent=0 // pred_fallthru
    _

</llo_original>
